<compile_context>
chip_gen: v5e
topology: v5e:2x2
jax: 0.10.0
libtpu: 0.0.40
codegen_flags: <defaults>
</compile_context>

<pallas_src>
import jax
import jax.numpy as jnp
from jax.experimental import pallas as pl
from jax.experimental.pallas import tpu as pltpu


def _round_up(a: int, b: int) -> int:
    return (a + b - 1) // b * b


def _cdiv(a: int, b: int) -> int:
    return (a + b - 1) // b


def highway_pallas(x, w_lin, b_lin, w_gate, b_gate):
    """Highway forward.

    x:   (batch, seq, size)
    w_*: (n_layers, size, size) stored as (in, out), i.e. y = x @ W + b
         (== x @ weight.T + bias for torch.nn.Linear).
    b_*: (n_layers, size)
    Returns the same shape/dtype as x.
    """
    B, L, S = x.shape
    n = int(w_lin.shape[0])
    M = B * L
    S_pad = _round_up(S, 128)          # lane-aligned accumulator width

    # ---- M tiling: VMEM-budgeted tm, even tile count >= 2 for 2 TCs --------
    budget = 24 * 1024 * 1024
    per_row_bytes = 5 * 4 * S_pad      # acc(f32) + ~2x in + ~2x out (upper bound)
    tm_cap = max(8, min(1024, (budget // per_row_bytes) // 8 * 8))
    M8 = _round_up(M, 8)
    n_tiles = _cdiv(M8, tm_cap)
    if M8 >= 16 and n_tiles < 2:
        n_tiles = 2                    # both v7x TensorCores get an M tile
    if n_tiles > 1 and n_tiles % 2:
        n_tiles += 1                   # even count for 2-core balance
    tm = _round_up(_cdiv(M8, n_tiles), 8)
    M_pad = n_tiles * tm

    x2d = x.reshape(M, S)              # native dtype, no f32 pad round-trip
    if M_pad != M:
        x2d = jnp.zeros((M_pad, S), x.dtype).at[:M].set(x2d)

    # ---- fused weights: cols [0:S_pad) linear branch, [S_pad:) gate branch --
    # Weights in bf16 (MXU inputs), biases in f32 (added post-matmul).
    w_f = jnp.zeros((n, S_pad, 2 * S_pad), jnp.bfloat16)
    w_f = w_f.at[:, :S, :S].set(w_lin.astype(jnp.bfloat16))
    w_f = w_f.at[:, :S, S_pad:S_pad + S].set(w_gate.astype(jnp.bfloat16))
    b_f = jnp.zeros((n, 1, 2 * S_pad), jnp.float32)
    b_f = b_f.at[:, 0, :S].set(b_lin.astype(jnp.float32))
    b_f = b_f.at[:, 0, S_pad:S_pad + S].set(b_gate.astype(jnp.float32))

    w_bytes = n * S_pad * 2 * S_pad * 2
    b_bytes = n * 2 * S_pad * 4
    weights_resident = (w_bytes + b_bytes) <= 12 * 1024 * 1024
    out_dtype = x.dtype

    def kernel(x_ref, w_ref, b_ref, o_ref, acc_ref):
        layer = pl.program_id(1)

        # Initialize the f32 VMEM accumulator from x (padded lanes kept zero so
        # they provably stay zero / never contaminate real columns).
        @pl.when(layer == 0)
        def _init():
            if S_pad != S:
                acc_ref[...] = jnp.zeros_like(acc_ref)
            acc_ref[:, :S] = x_ref[...].astype(jnp.float32)

        if weights_resident:
            w = w_ref[layer]            # (S_pad, 2*S_pad) bf16, VMEM-resident
            b = b_ref[layer]            # (1, 2*S_pad) f32
        else:
            w = w_ref[...]
            b = b_ref[...]

        xv = acc_ref[...]                                       # (tm, S_pad) f32
        # One fused bf16 matmul for both branches, f32 accumulation.
        y = jnp.dot(xv.astype(jnp.bfloat16), w,
                    preferred_element_type=jnp.float32)
        y = y + b
        nonlinear = jnp.maximum(y[:, :S_pad], 0.0)
        # sigmoid via exp + approximate reciprocal (both on the EUP slot).
        gate = pl.reciprocal(1.0 + jnp.exp(-y[:, S_pad:]), approx=True)
        # x + g*(nl - x)  ==  g*nl + (1-g)*x
        acc_ref[...] = xv + gate * (nonlinear - xv)

        @pl.when(layer == n - 1)
        def _finalize():
            o_ref[...] = acc_ref[:, :S].astype(o_ref.dtype)

    if weights_resident:
        w_spec = pl.BlockSpec((n, S_pad, 2 * S_pad), lambda m, l: (0, 0, 0))
        b_spec = pl.BlockSpec((n, 1, 2 * S_pad), lambda m, l: (0, 0, 0))
        wb_vmem = 2 * (w_bytes + b_bytes)
    else:
        pipe = {"pipeline_mode": pl.Buffered(3)} if n >= 3 else {}
        w_spec = pl.BlockSpec((pl.Squeezed(), S_pad, 2 * S_pad),
                              lambda m, l: (l, 0, 0), **pipe)
        b_spec = pl.BlockSpec((pl.Squeezed(), 1, 2 * S_pad),
                              lambda m, l: (l, 0, 0), **pipe)
        wb_vmem = 3 * (w_bytes + b_bytes) // max(n, 1)

    vmem_est = (wb_vmem
                + 2 * tm * S * jnp.dtype(x.dtype).itemsize       # x blocks
                + 2 * tm * S * jnp.dtype(out_dtype).itemsize     # out blocks
                + tm * S_pad * 4                                  # accumulator
                + (2 << 20))
    vmem_limit = int(min(max(vmem_est, 8 << 20), 48 << 20))

    out = pl.pallas_call(
        kernel,
        out_shape=jax.ShapeDtypeStruct((M_pad, S), out_dtype),
        grid_spec=pltpu.PrefetchScalarGridSpec(
            num_scalar_prefetch=0,
            grid=(n_tiles, n),                    # M tiles outer, layers inner
            in_specs=[
                pl.BlockSpec((tm, S), lambda m, l: (m, 0)),   # x tile (fetched once per m)
                w_spec,                                        # fused weights
                b_spec,                                        # fused biases
            ],
            out_specs=pl.BlockSpec((tm, S), lambda m, l: (m, 0)),
            scratch_shapes=[pltpu.VMEM((tm, S_pad), jnp.float32)],
        ),
        compiler_params=pltpu.CompilerParams(
            dimension_semantics=("parallel", "arbitrary"),
            vmem_limit_bytes=vmem_limit,
        ),
    )(x2d, w_f, b_f)

    if M_pad != M:
        out = out[:M]
    return out.reshape(B, L, S)


def highway_ref(x2d, w_lin, b_lin, w_gate, b_gate, mm_dtype=jnp.float32):
    """Pure-JAX reference (PyTorch semantics); mm_dtype mimics the MXU input dtype."""
    x = x2d.astype(jnp.float32)
    for i in range(w_lin.shape[0]):
        xm = x.astype(mm_dtype)
        lin = jnp.dot(xm, w_lin[i].astype(mm_dtype),
                      preferred_element_type=jnp.float32) + b_lin[i]
        gat = jnp.dot(xm, w_gate[i].astype(mm_dtype),
                      preferred_element_type=jnp.float32) + b_gate[i]
        g = jax.nn.sigmoid(gat)
        nl = jax.nn.relu(lin)
        x = g * nl + (1.0 - g) * x
    return x


if __name__ == "__main__":
    layer_num = 2
    size = 32          # hidden size (lane axis before padding)
    batch, seq = 2, 8

    key = jax.random.PRNGKey(0)
    k_x, k_wl, k_bl, k_wg, k_bg = jax.random.split(key, 5)

    # nn.Linear-style init: U(-1/sqrt(size), 1/sqrt(size)); stored as (in, out).
    bound = 1.0 / (size ** 0.5)
    w_lin = jax.random.uniform(k_wl, (layer_num, size, size), jnp.float32, -bound, bound)
    b_lin = jax.random.uniform(k_bl, (layer_num, size), jnp.float32, -bound, bound)
    w_gate = jax.random.uniform(k_wg, (layer_num, size, size), jnp.float32, -bound, bound)
    b_gate = jax.random.uniform(k_bg, (layer_num, size), jnp.float32, -bound, bound)

    x = jax.random.normal(k_x, (batch, seq, size), jnp.float32)

    out = highway_pallas(x, w_lin, b_lin, w_gate, b_gate)
    out = jax.block_until_ready(out)

    x2d = x.reshape(-1, size)
    ref_bf16 = highway_ref(x2d, w_lin, b_lin, w_gate, b_gate, jnp.bfloat16).reshape(x.shape)
    ref_f32 = highway_ref(x2d, w_lin, b_lin, w_gate, b_gate, jnp.float32).reshape(x.shape)

    assert out.shape == x.shape and out.dtype == x.dtype
    # Tight check vs a reference that uses the same bf16 matmul inputs.
    assert jnp.allclose(out, ref_bf16, atol=1e-2, rtol=1e-2), "mismatch vs bf16-matmul reference"
    # Sanity check vs the exact f32 PyTorch-semantics reference (bf16 rounding slack).
    assert jnp.allclose(out, ref_f32, atol=5e-2, rtol=5e-2), "mismatch vs f32 reference"

    print("KERNEL_OK")
</pallas_src>

<mosaic_0001>
module attributes {stable_mosaic.version = 11 : i64} {
  func.func @kernel(%arg0: i32, %arg1: i32, %arg2: memref<8x32xf32, #tpu.memory_space<vmem>>, %arg3: memref<2x128x256xbf16, #tpu.memory_space<vmem>>, %arg4: memref<2x1x256xf32, #tpu.memory_space<vmem>>, %arg5: memref<8x32xf32, #tpu.memory_space<vmem>>, %arg6: memref<8x128xf32, #tpu.memory_space<vmem>>) attributes {dimension_semantics = [#tpu.dimension_semantics<parallel>, #tpu.dimension_semantics<arbitrary>], iteration_bounds = array<i64: 2, 2>, scalar_prefetch = 0 : i64, scratch_operands = 1 : i64, tpu.core_type = #tpu.core_type<tc>, window_params = [{transform_indices = @transform_0, window_bounds = array<i64: 8, 32>}, {pipeline_mode = #tpu.pipeline_mode<synchronous>, transform_indices = @transform_1, window_bounds = array<i64: 2, 128, 256>}, {pipeline_mode = #tpu.pipeline_mode<synchronous>, transform_indices = @transform_2, window_bounds = array<i64: 2, 1, 256>}, {transform_indices = @transform_3, window_bounds = array<i64: 8, 32>}]} {
    %c0_i32 = arith.constant 0 : i32
    %0 = arith.cmpi eq, %arg1, %c0_i32 : i32
    %1 = arith.extui %0 : i1 to i32
    %c0_i32_0 = arith.constant 0 : i32
    %2 = arith.cmpi ne, %1, %c0_i32_0 : i32
    scf.if %2 {
      %cst_12 = arith.constant 0.000000e+00 : f32
      %31 = vector.broadcast %cst_12 : f32 to vector<8x128xf32>
      %c0_13 = arith.constant 0 : index
      %c0_14 = arith.constant 0 : index
      %32 = vector.load %arg6[%c0_13, %c0_14] : memref<8x128xf32, #tpu.memory_space<vmem>>, vector<8x128xf32>
      tpu.vector_store %arg6[%c0_13, %c0_14], %31 {strides = array<i32>} : memref<8x128xf32, #tpu.memory_space<vmem>>, vector<8x128xf32>,
      %c0_15 = arith.constant 0 : index
      %c0_16 = arith.constant 0 : index
      %33 = vector.load %arg2[%c0_15, %c0_16] : memref<8x32xf32, #tpu.memory_space<vmem>>, vector<8x32xf32>
      %c0_17 = arith.constant 0 : index
      %c0_18 = arith.constant 0 : index
      %34 = vector.load %arg6[%c0_17, %c0_18] : memref<8x128xf32, #tpu.memory_space<vmem>>, vector<8x32xf32>
      tpu.vector_store %arg6[%c0_17, %c0_18], %33 {strides = array<i32>} : memref<8x128xf32, #tpu.memory_space<vmem>>, vector<8x32xf32>,
    } else {
    }
    %3 = arith.index_cast %arg1 : i32 to index
    %c0 = arith.constant 0 : index
    %c0_1 = arith.constant 0 : index
    %4 = vector.load %arg3[%3, %c0, %c0_1] : memref<2x128x256xbf16, #tpu.memory_space<vmem>>, vector<1x128x256xbf16>
    %5 = vector.shape_cast %4 : vector<1x128x256xbf16> to vector<128x256xbf16>
    %6 = arith.index_cast %arg1 : i32 to index
    %c0_2 = arith.constant 0 : index
    %c0_3 = arith.constant 0 : index
    %7 = vector.load %arg4[%6, %c0_2, %c0_3] : memref<2x1x256xf32, #tpu.memory_space<vmem>>, vector<1x1x256xf32>
    %8 = vector.shape_cast %7 : vector<1x1x256xf32> to vector<1x256xf32>
    %c0_4 = arith.constant 0 : index
    %c0_5 = arith.constant 0 : index
    %9 = vector.load %arg6[%c0_4, %c0_5] : memref<8x128xf32, #tpu.memory_space<vmem>>, vector<8x128xf32>
    %10 = arith.truncf %9 : vector<8x128xf32> to vector<8x128xbf16>
    %cst = arith.constant dense<0.000000e+00> : vector<8x256xf32>
    %11 = tpu.matmul %10, %5, %cst {dimension_numbers = #tpu.dot_dimension_numbers<[1], [0], [0], [1], [0, 0, 1, 1], [], []>} : vector<8x128xbf16>, vector<128x256xbf16>, vector<8x256xf32> -> vector<8x256xf32>
    %12 = vector.broadcast %8 : vector<1x256xf32> to vector<8x256xf32>
    %13 = arith.addf %11, %12 : vector<8x256xf32>
    %14 = vector.extract_strided_slice %13 {offsets = [0, 0], sizes = [8, 128], strides = [1, 1]} : vector<8x256xf32> to vector<8x128xf32>
    %cst_6 = arith.constant 0.000000e+00 : f32
    %15 = vector.broadcast %cst_6 : f32 to vector<8x128xf32>
    %16 = arith.maximumf %14, %15 : vector<8x128xf32>
    %17 = vector.extract_strided_slice %13 {offsets = [0, 128], sizes = [8, 128], strides = [1, 1]} : vector<8x256xf32> to vector<8x128xf32>
    %cst_7 = arith.constant 0.000000e+00 : f32
    %18 = vector.broadcast %cst_7 : f32 to vector<8x128xf32>
    %19 = arith.subf %18, %17 : vector<8x128xf32>
    %20 = math.exp %19 : vector<8x128xf32>
    %cst_8 = arith.constant 1.000000e+00 : f32
    %21 = vector.broadcast %cst_8 : f32 to vector<8x128xf32>
    %22 = arith.addf %21, %20 : vector<8x128xf32>
    %23 = tpu.reciprocal %22 {approx = true} : vector<8x128xf32> -> vector<8x128xf32>
    %24 = arith.subf %16, %9 : vector<8x128xf32>
    %25 = arith.mulf %23, %24 : vector<8x128xf32>
    %26 = arith.addf %9, %25 : vector<8x128xf32>
    %c0_9 = arith.constant 0 : index
    %c0_10 = arith.constant 0 : index
    %27 = vector.load %arg6[%c0_9, %c0_10] : memref<8x128xf32, #tpu.memory_space<vmem>>, vector<8x128xf32>
    tpu.vector_store %arg6[%c0_9, %c0_10], %26 {strides = array<i32>} : memref<8x128xf32, #tpu.memory_space<vmem>>, vector<8x128xf32>,
    %c1_i32 = arith.constant 1 : i32
    %28 = arith.cmpi eq, %arg1, %c1_i32 : i32
    %29 = arith.extui %28 : i1 to i32
    %c0_i32_11 = arith.constant 0 : i32
    %30 = arith.cmpi ne, %29, %c0_i32_11 : i32
    scf.if %30 {
      %c0_12 = arith.constant 0 : index
      %c0_13 = arith.constant 0 : index
      %31 = vector.load %arg6[%c0_12, %c0_13] : memref<8x128xf32, #tpu.memory_space<vmem>>, vector<8x32xf32>
      %c0_14 = arith.constant 0 : index
      %c0_15 = arith.constant 0 : index
      %32 = vector.load %arg5[%c0_14, %c0_15] : memref<8x32xf32, #tpu.memory_space<vmem>>, vector<8x32xf32>
      tpu.vector_store %arg5[%c0_14, %c0_15], %31 {strides = array<i32>} : memref<8x32xf32, #tpu.memory_space<vmem>>, vector<8x32xf32>,
    } else {
    }
    return
  }
  func.func @transform_0(%arg0: i32, %arg1: i32) -> (i32, i32) {
    %c0_i32 = arith.constant 0 : i32
    %c0_i32_0 = arith.constant 0 : i32
    return %arg0, %c0_i32 : i32, i32
  }
  func.func @transform_1(%arg0: i32, %arg1: i32) -> (i32, i32, i32) {
    %c0_i32 = arith.constant 0 : i32
    %c0_i32_0 = arith.constant 0 : i32
    %c0_i32_1 = arith.constant 0 : i32
    %c0_i32_2 = arith.constant 0 : i32
    return %c0_i32, %c0_i32_0, %c0_i32_1 : i32, i32, i32
  }
  func.func @transform_2(%arg0: i32, %arg1: i32) -> (i32, i32, i32) {
    %c0_i32 = arith.constant 0 : i32
    %c0_i32_0 = arith.constant 0 : i32
    %c0_i32_1 = arith.constant 0 : i32
    %c0_i32_2 = arith.constant 0 : i32
    return %c0_i32, %c0_i32_0, %c0_i32_1 : i32, i32, i32
  }
  func.func @transform_3(%arg0: i32, %arg1: i32) -> (i32, i32) {
    %c0_i32 = arith.constant 0 : i32
    %c0_i32_0 = arith.constant 0 : i32
    return %arg0, %c0_i32 : i32, i32
  }
}

</mosaic_0001>

<llo_original>
// kernel: tpu_custom_call.1
$region0: #{tpu_custom_call.1}
  #allocation0 [shape = 'u32[]', space=smem, size = 0x4, offset = 0x4, fixed_abs, tag = 'smem constant byte address 0x4 - core index']
  #allocation1 [shape = 'u32[72,128]{1,0:T(1,128)}', space=vmem, size = 0x9000, scoped, tag = 'internal scratch']
  #allocation2 [shape = 'f32[8,128]{1,0:T(8,128)}', space=vmem, size = 0x1000, scoped, tag = 'scratch operand']
  %s0 = inlined_call_operand.hbm [shape: f32[16,32], index: 0, kind: input, shape index: {}]
  %s1 = inlined_call_operand.hbm [shape: bf16[2,128,256], index: 1, kind: input, shape index: {}]
  %s2 = inlined_call_operand.hbm [shape: f32[2,1,256], index: 2, kind: input, shape index: {}]
  %s3 = inlined_call_operand.hbm [shape: f32[16,32], index: 3, kind: output, shape index: {}]
  %s4 = sld [smem:[#allocation0]]
  $region65: #{tpu_custom_call.1} parent=0
    _
  %s6 = ssub.s32 1, %s4
  %s7 = scalar_select 0, %s6, %s4
  $region1: #{tpu_custom_call.1} parent=0
    #allocation3 [shape = 'u8[8192]{0}', space=vmem, size = 0x2000, scoped, tag = 'input window, operand 0']
    #allocation4 [shape = 's32[2]{0}', space=sflag, size = 0x8, scoped, tag = 'scoped memory for tpu_custom_call.1']
    #allocation5 [shape = 's32[2]{0}', space=sflag, size = 0x8, scoped, tag = 'scoped memory for tpu_custom_call.1']
    #allocation6 [shape = 'u8[131072]{0}', space=vmem, size = 0x20000, scoped, tag = 'input window, operand 1, single buffered']
    #allocation7 [shape = 's32[1]{0}', space=sflag, size = 0x4, scoped, tag = 'scoped memory for tpu_custom_call.1']
    #allocation8 [shape = 'u8[2048]{0}', space=vmem, size = 0x800, scoped, tag = 'input window, operand 2, single buffered']
    #allocation9 [shape = 'u8[8192]{0}', space=vmem, size = 0x2000, scoped, tag = 'output window, operand 0']
    %8 = vsyncpa [#allocation4], 0
    %s9 = scalar_lea.sflag [#allocation4], 1
    %10 = vsyncpa %s9, 0
    %11 = vsyncpa [#allocation7], 0
    %12 = vsyncpa [#allocation5], 0
    %s13 = scalar_lea.sflag [#allocation5], 1
    %14 = vsyncpa %s13, 0
    loop: start=0, step=1, limit=6
    $region2: #{tpu_custom_call.1} parent=1 // loop_pre_header
      _
    $region3: #{tpu_custom_call.1} parent=1 // loop_header
      %s16 = sphi 0, %s20
      %p17 = scmp.ge.s32.totalorder %s16, 6
      %s23 = sphi 0, %s35
      %s24 = sphi 0, %s31
      %s25 = sphi 0, %s23
      %s26 = sphi 0, %s24
      %s27 = sphi 0, %s25
      %s28 = sphi 0, %s26
      %s38 = sphi 0, %s40
      %s41 = sphi 0, %s38
      %s42 = sphi 0, %s41
      %s58 = sphi 0, %s42
      %s62 = sphi 0, %s62
      %s64 = sphi 0, %s62
      %s65 = sphi 0, %s64
      %s79 = sphi 0, %s65
      %s83 = sphi 0, %s83
      %s85 = sphi 0, %s83
      %s86 = sphi 0, %s85
      %s100 = sphi 0, %s86
      %s106 = sphi 0, %s108
      %s109 = sphi 0, %s106
      %s110 = sphi 0, %s109
      %s126 = sphi 0, %s110
    $region4: #{tpu_custom_call.1} parent=1 // loop_header_branch
      %19 = sbr.rel (%p17) target = $region8
    $region5: #{tpu_custom_call.1} parent=1 // loop_body
      %s21 = ssub.s32 %s16, 1
      %s22 = ssub.s32 %s16, 2
      %s29 = sadd.s32 1, %s24
      %p30 = scmp.ge.s32.totalorder %s29, 2
      %s31 = scalar_select %p30, 0, %s29
      %s32 = sadd.s32 1, %s23
      %s33 = scalar_select %p30, %s32, %s23
      %p34 = scmp.ge.s32.totalorder %s33, 2
      %s35 = scalar_select %p34, 0, %s33
      %s36 = ssub.s32 %s23, %s35
      %p37 = scmp.eq.s32.totalorder %s36, 0
      %s39 = sadd.s32 %s38, 1
      %s40 = scalar_select %p37, %s38, %s39
      %p43 = pneg %p37
      %p44 = scmp.eq.s32.totalorder %s16, 3
      %p45 = por %p43, %p44
      %p46 = scmp.ne.s32.totalorder %s38, %s41
      %p47 = scmp.eq.s32.totalorder %s16, 0
      %p48 = por %p46, %p47
      %p49 = scmp.ne.s32.totalorder %s38, %s41
      %p50 = scmp.eq.s32.totalorder %s21, 3
      %p51 = por %p49, %p50
      %p52 = scmp.ne.s32.totalorder %s41, %s42
      %p53 = scmp.eq.s32.totalorder %s21, 0
      %p54 = por %p52, %p53
      %p55 = scmp.ne.s32.totalorder %s41, %s42
      %p56 = scmp.eq.s32.totalorder %s22, 3
      %p57 = por %p55, %p56
      %p59 = scmp.ne.s32.totalorder %s42, %s58
      %p60 = scmp.eq.s32.totalorder %s22, 0
      %p61 = por %p59, %p60
      %s63 = sadd.s32 %s62, 1
      %p66 = scmp.eq.s32.totalorder %s16, 3
      %p67 = scmp.ne.s32.totalorder %s62, %s64
      %p68 = scmp.eq.s32.totalorder %s16, 0
      %p69 = por %p67, %p68
      %p70 = scmp.ne.s32.totalorder %s62, %s64
      %p71 = scmp.eq.s32.totalorder %s21, 3
      %p72 = por %p70, %p71
      %p73 = scmp.ne.s32.totalorder %s64, %s65
      %p74 = scmp.eq.s32.totalorder %s21, 0
      %p75 = por %p73, %p74
      %p76 = scmp.ne.s32.totalorder %s64, %s65
      %p77 = scmp.eq.s32.totalorder %s22, 3
      %p78 = por %p76, %p77
      %p80 = scmp.ne.s32.totalorder %s65, %s79
      %p81 = scmp.eq.s32.totalorder %s22, 0
      %p82 = por %p80, %p81
      %s84 = sadd.s32 %s83, 1
      %p87 = scmp.eq.s32.totalorder %s16, 3
      %p88 = scmp.ne.s32.totalorder %s83, %s85
      %p89 = scmp.eq.s32.totalorder %s16, 0
      %p90 = por %p88, %p89
      %p91 = scmp.ne.s32.totalorder %s83, %s85
      %p92 = scmp.eq.s32.totalorder %s21, 3
      %p93 = por %p91, %p92
      %p94 = scmp.ne.s32.totalorder %s85, %s86
      %p95 = scmp.eq.s32.totalorder %s21, 0
      %p96 = por %p94, %p95
      %p97 = scmp.ne.s32.totalorder %s85, %s86
      %p98 = scmp.eq.s32.totalorder %s22, 3
      %p99 = por %p97, %p98
      %p101 = scmp.ne.s32.totalorder %s86, %s100
      %p102 = scmp.eq.s32.totalorder %s22, 0
      %p103 = por %p101, %p102
      %s104 = ssub.s32 %s23, %s35
      %p105 = scmp.eq.s32.totalorder %s104, 0
      %s107 = sadd.s32 %s106, 1
      %s108 = scalar_select %p105, %s106, %s107
      %p111 = pneg %p105
      %p112 = scmp.eq.s32.totalorder %s16, 3
      %p113 = por %p111, %p112
      %p114 = scmp.ne.s32.totalorder %s106, %s109
      %p115 = scmp.eq.s32.totalorder %s16, 0
      %p116 = por %p114, %p115
      %p117 = scmp.ne.s32.totalorder %s106, %s109
      %p118 = scmp.eq.s32.totalorder %s21, 3
      %p119 = por %p117, %p118
      %p120 = scmp.ne.s32.totalorder %s109, %s110
      %p121 = scmp.eq.s32.totalorder %s21, 0
      %p122 = por %p120, %p121
      %p123 = scmp.ne.s32.totalorder %s109, %s110
      %p124 = scmp.eq.s32.totalorder %s22, 3
      %p125 = por %p123, %p124
      %p127 = scmp.ne.s32.totalorder %s110, %s126
      %p128 = scmp.eq.s32.totalorder %s22, 0
      %p129 = por %p127, %p128
      %p130 = scmp.le.s32.totalorder 1, %s16
      %p131 = scmp.lt.s32.totalorder %s16, 5
      %p132 = pnand %p130, %p131
      %p133 = pneg %p132
      // Predicated region
      $region9: #{tpu_custom_call.1} parent=5 // pred_check
        _
      $region10: #{tpu_custom_call.1} parent=5 // pred_check_branch
        %135 = sbr.rel (%p132) target = $region12
      $region11: #{tpu_custom_call.1} parent=5 // pred_region
        %s136 = ssub.s32 %s16, 1
        // Predicated region
        $region13: #{tpu_custom_call.1} parent=11 // pred_check
          %p137 = pneg %p75
        $region14: #{tpu_custom_call.1} parent=11 // pred_check_branch
          %139 = sbr.rel (%p137) target = $region16
        $region15: #{tpu_custom_call.1} parent=11 // pred_region
          %141 = vsyncadd [#allocation7], 0
          %s142 = sshll.u32 %s1, 4
          %s143 = int_to_ptr.hbm [resolvable:$true] %s142
          %s144 = sshll.u32 [#allocation6], 4
          %s145 = int_to_ptr.vmem [resolvable:$true] %s144
          %150 = dma.hbm_to_vmem [thread:$0]  %s143, 4096, %s145, [#allocation7], 128, 128, 8
        $region16: #{tpu_custom_call.1} parent=11 // pred_fallthru
          _
        // Predicated region
        $region17: #{tpu_custom_call.1} parent=11 // pred_check
          %p151 = pneg %p96
        $region18: #{tpu_custom_call.1} parent=11 // pred_check_branch
          %153 = sbr.rel (%p151) target = $region20
        $region19: #{tpu_custom_call.1} parent=11 // pred_region
          %155 = vsyncadd [#allocation7], 0
          %s156 = sshll.u32 %s2, 4
          %s157 = int_to_ptr.hbm [resolvable:$true] %s156
          %s158 = sshll.u32 [#allocation8], 4
          %s159 = int_to_ptr.vmem [resolvable:$true] %s158
          %164 = dma.hbm_to_vmem [thread:$0]  %s157, 64, %s159, [#allocation7], 32, 32, 2
        $region20: #{tpu_custom_call.1} parent=11 // pred_fallthru
          _
      $region12: #{tpu_custom_call.1} parent=5 // pred_fallthru
        _
      %p165 = scmp.lt.s32.totalorder %s16, 4
      // Predicated region
      $region21: #{tpu_custom_call.1} parent=5 // pred_check
        %p166 = pneg %p165
      $region22: #{tpu_custom_call.1} parent=5 // pred_check_branch
        %168 = sbr.rel (%p166) target = $region24
      $region23: #{tpu_custom_call.1} parent=5 // pred_region
        // Predicated region
        $region25: #{tpu_custom_call.1} parent=23 // pred_check
          %p169 = pneg %p48
        $region26: #{tpu_custom_call.1} parent=23 // pred_check_branch
          %171 = sbr.rel (%p169) target = $region28
        $region27: #{tpu_custom_call.1} parent=23 // pred_region
          %s172 = sand.u32 %s38, 1
          %s173 = scalar_lea.sflag [#allocation4], %s172
          %s174 = sand.u32 %s38, 1
          %s175 = smul.addr %s174, 8
          %s176 = scalar_lea.vmem [#allocation3], %s175
          %178 = vsyncadd %s173, 0
          %s179 = smul.addr %s23, 8
          %s180 = scalar_lea.hbm %s0, %s179
          %s182 = sshll.u32 %s180, 4
          %s183 = int_to_ptr.hbm [resolvable:$true] %s182
          %s184 = sshll.u32 %s176, 4
          %s185 = int_to_ptr.vmem [resolvable:$true] %s184
          %187 = dma.hbm_to_vmem [thread:$0]  %s183, 128, %s185, %s173
        $region28: #{tpu_custom_call.1} parent=23 // pred_fallthru
          _
      $region24: #{tpu_custom_call.1} parent=5 // pred_fallthru
        _
      %p188 = scmp.le.s32.totalorder 1, %s16
      %p189 = scmp.lt.s32.totalorder %s16, 5
      %p190 = pnand %p188, %p189
      %p191 = pneg %p190
      // Predicated region
      $region29: #{tpu_custom_call.1} parent=5 // pred_check
        _
      $region30: #{tpu_custom_call.1} parent=5 // pred_check_branch
        %193 = sbr.rel (%p190) target = $region32
      $region31: #{tpu_custom_call.1} parent=5 // pred_region
        %s194 = ssub.s32 %s16, 1
        %s195 = sand.u32 %s41, 1
        %s196 = scalar_lea.sflag [#allocation4], %s195
        %s197 = sand.u32 %s41, 1
        %s198 = smul.addr %s197, 8
        %s199 = scalar_lea.vmem [#allocation3], %s198
        // Predicated region
        $region33: #{tpu_custom_call.1} parent=31 // pred_check
          %p200 = pneg %p54
        $region34: #{tpu_custom_call.1} parent=31 // pred_check_branch
          %202 = sbr.rel (%p200) target = $region36
        $region35: #{tpu_custom_call.1} parent=31 // pred_region
          %204 = dma.done %s196, 128
        $region36: #{tpu_custom_call.1} parent=31 // pred_fallthru
          _
        // Predicated region
        $region37: #{tpu_custom_call.1} parent=31 // pred_check
          %p205 = pneg %p75
        $region38: #{tpu_custom_call.1} parent=31 // pred_check_branch
          %207 = sbr.rel (%p205) target = $region40
        $region39: #{tpu_custom_call.1} parent=31 // pred_region
          %209 = dma.done [#allocation7], 4096
        $region40: #{tpu_custom_call.1} parent=31 // pred_fallthru
          _
        // Predicated region
        $region41: #{tpu_custom_call.1} parent=31 // pred_check
          %p210 = pneg %p96
        $region42: #{tpu_custom_call.1} parent=31 // pred_check_branch
          %212 = sbr.rel (%p210) target = $region44
        $region43: #{tpu_custom_call.1} parent=31 // pred_region
          %214 = dma.done [#allocation7], 64
        $region44: #{tpu_custom_call.1} parent=31 // pred_fallthru
          _
        %s215 = sand.u32 %s41, 1
        %s216 = scalar_lea.sflag [#allocation4], %s215
        %s217 = sand.u32 %s41, 1
        %s218 = smul.addr %s217, 8
        %s219 = scalar_lea.vmem [#allocation3], %s218
        %p220 = pneg %p54
        %p221 = pneg %p51
        %p222 = pneg %p75
        %p223 = pneg %p72
        %p224 = pneg %p96
        %p225 = pneg %p93
        %p226 = pneg %p122
        %p227 = pneg %p119
        %s228 = sand.u32 %s109, 1
        %s229 = scalar_lea.sflag [#allocation5], %s228
        %s230 = sand.u32 %s109, 1
        %s231 = smul.addr %s230, 8
        %s232 = scalar_lea.vmem [#allocation9], %s231
        %p233 = scmp.eq.s32.totalorder %s26, 0
        // Predicated region
        $region45: #{tpu_custom_call.1} parent=31 // pred_check
          %p234 = pneg %p233
        $region46: #{tpu_custom_call.1} parent=31 // pred_check_branch
          %236 = sbr.rel (%p234) target = $region48
        $region47: #{tpu_custom_call.1} parent=31 // pred_region
          %237 = vst [vmem:[#allocation2] sm:$0xff] 0.0
          %v238 = vld [vmem:[%s199] sm:$0xff]
          %vm239 = vcmask 261120
          %240 = vst.msk [vmem:[#allocation2] sm:$0xff] %vm239, %v238
        $region48: #{tpu_custom_call.1} parent=31 // pred_fallthru
          _
        %s241 = smul.u32 %s26, 32
        %s242 = smul.addr %s241, 4
        %s243 = scalar_lea.vmem [#allocation6], %s242
        %v244 = vld [vmem:[%s243] sm:$0xff]
        %v245 = vld [vmem:[%s243 + $0x8] sm:$0xff]
        %v246 = vld [vmem:[%s243 + $0x10] sm:$0xff]
        %v247 = vld [vmem:[%s243 + $0x18] sm:$0xff]
        %v248 = vld [vmem:[%s243 + $0x20] sm:$0xff]
        %v249 = vld [vmem:[%s243 + $0x28] sm:$0xff]
        %v250 = vld [vmem:[%s243 + $0x30] sm:$0xff]
        %v251 = vld [vmem:[%s243 + $0x38] sm:$0xff]
        %v252 = vld [vmem:[%s243 + $0x40] sm:$0xff]
        %v253 = vld [vmem:[%s243 + $0x48] sm:$0xff]
        %v254 = vld [vmem:[%s243 + $0x50] sm:$0xff]
        %v255 = vld [vmem:[%s243 + $0x58] sm:$0xff]
        %v256 = vld [vmem:[%s243 + $0x60] sm:$0xff]
        %v257 = vld [vmem:[%s243 + $0x68] sm:$0xff]
        %v258 = vld [vmem:[%s243 + $0x70] sm:$0xff]
        %v259 = vld [vmem:[%s243 + $0x78] sm:$0xff]
        %s260 = smul.u32 %s26, 2
        %s261 = scalar_lea.vmem [#allocation8], %s260
        %v262 = vld [vmem:[%s261] sm:$0x3]
        %v263 = vld [vmem:[#allocation2] sm:$0xff]
        %v264 = vpack.c.bf16 %v263, %v263
        %v266 = vperm.slane %v262, 0
        %v267 = vperm.slane %v262, 1
        %v286 = vunpack.c.l.b16 %v244
        %v287 = vunpack.c.h.b16 %v244
        %v288 = vunpack.c.l.b16 %v245
        %v289 = vunpack.c.h.b16 %v245
        %v290 = vunpack.c.l.b16 %v246
        %v291 = vunpack.c.h.b16 %v246
        %v292 = vunpack.c.l.b16 %v247
        %v293 = vunpack.c.h.b16 %v247
        %v294 = vunpack.c.l.b16 %v248
        %v295 = vunpack.c.h.b16 %v248
        %v296 = vunpack.c.l.b16 %v249
        %v297 = vunpack.c.h.b16 %v249
        %v298 = vunpack.c.l.b16 %v250
        %v299 = vunpack.c.h.b16 %v250
        %v300 = vunpack.c.l.b16 %v251
        %v301 = vunpack.c.h.b16 %v251
        %v302 = vunpack.c.l.b16 %v252
        %v303 = vunpack.c.h.b16 %v252
        %v304 = vunpack.c.l.b16 %v253
        %v305 = vunpack.c.h.b16 %v253
        %v306 = vunpack.c.l.b16 %v254
        %v307 = vunpack.c.h.b16 %v254
        %v308 = vunpack.c.l.b16 %v255
        %v309 = vunpack.c.h.b16 %v255
        %v310 = vunpack.c.l.b16 %v256
        %v311 = vunpack.c.h.b16 %v256
        %v312 = vunpack.c.l.b16 %v257
        %v313 = vunpack.c.h.b16 %v257
        %v314 = vunpack.c.l.b16 %v258
        %v315 = vunpack.c.h.b16 %v258
        %v316 = vunpack.c.l.b16 %v259
        %v317 = vunpack.c.h.b16 %v259
        %v318 = vpack.c.b16 %v288, %v286
        %v319 = vpack.c.b16 %v289, %v287
        %v320 = vpack.c.b16 %v292, %v290
        %v321 = vpack.c.b16 %v293, %v291
        %v322 = vpack.c.b16 %v296, %v294
        %v323 = vpack.c.b16 %v297, %v295
        %v324 = vpack.c.b16 %v300, %v298
        %v325 = vpack.c.b16 %v301, %v299
        %v326 = vpack.c.b16 %v304, %v302
        %v327 = vpack.c.b16 %v305, %v303
        %v328 = vpack.c.b16 %v308, %v306
        %v329 = vpack.c.b16 %v309, %v307
        %v330 = vpack.c.b16 %v312, %v310
        %v331 = vpack.c.b16 %v313, %v311
        %v332 = vpack.c.b16 %v316, %v314
        %v333 = vpack.c.b16 %v317, %v315
        %350 = vmatpush.bf16.msra.mxu0 %v332
        %351 = vmatpush.bf16.msra.mxu0 %v330
        %352 = vmatpush.bf16.msra.mxu0 %v328
        %353 = vmatpush.bf16.msra.mxu0 %v326
        %354 = vmatpush.bf16.msra.mxu0 %v324
        %355 = vmatpush.bf16.msra.mxu0 %v322
        %356 = vmatpush.bf16.msra.mxu0 %v320
        %357 = vmatpush.bf16.msra.mxu0 %v318
        %358 = vmatmul.bf16.gmra.mxu0 %v264
        %v359 = vpop.f32.mrf.mxu0
        %v360 = vadd.f32 %v266, %v359
        %v361 = vpop.f32.mrf.mxu0
        %362 = vdwg.mxu0
        %363 = vmatpush.bf16.msra.mxu0 %v333
        %364 = vmatpush.bf16.msra.mxu0 %v331
        %365 = vmatpush.bf16.msra.mxu0 %v329
        %366 = vmatpush.bf16.msra.mxu0 %v327
        %367 = vmatpush.bf16.msra.mxu0 %v325
        %368 = vmatpush.bf16.msra.mxu0 %v323
        %369 = vmatpush.bf16.msra.mxu0 %v321
        %370 = vmatpush.bf16.msra.mxu0 %v319
        %371 = vmatmul.bf16.gmra.mxu0 %v264
        %v372 = vpop.f32.mrf.mxu0
        %v373 = vadd.f32 %v267, %v372
        %v374 = vpop.f32.mrf.mxu0
        %375 = vdwg.mxu0
        %v376 = vmax.f32 %v360, 0.0
        %v377 = vsub.f32 0.0, %v373
        %v378 = vmul.f32 %v377, 1.442695
        %v379 = vpow.pop %v378
        %v380 = vadd.f32 %v379, 1.0
        %v381 = vrcp.pop %v380
        %v382 = vsub.f32 %v376, %v263
        %v383 = vmul.f32 %v381, %v382
        %v384 = vadd.f32 %v263, %v383
        %385 = vst [vmem:[#allocation2] sm:$0xff] %v384
        %p386 = scmp.eq.s32.totalorder %s26, 1
        // Predicated region
        $region49: #{tpu_custom_call.1} parent=31 // pred_check
          %p387 = pneg %p386
        $region50: #{tpu_custom_call.1} parent=31 // pred_check_branch
          %389 = sbr.rel (%p387) target = $region52
        $region51: #{tpu_custom_call.1} parent=31 // pred_region
          %v390 = vld [vmem:[#allocation2] sm:$0xff]
          %vm391 = vcmask 261120
          %392 = vst.msk [vmem:[%s232] sm:$0xff] %vm391, %v390
        $region52: #{tpu_custom_call.1} parent=31 // pred_fallthru
          _
        %s393 = sand.u32 %s109, 1
        %s394 = scalar_lea.sflag [#allocation5], %s393
        %s395 = sand.u32 %s109, 1
        %s396 = smul.addr %s395, 8
        %s397 = scalar_lea.vmem [#allocation9], %s396
        // Predicated region
        $region53: #{tpu_custom_call.1} parent=31 // pred_check
          %p398 = pneg %p119
        $region54: #{tpu_custom_call.1} parent=31 // pred_check_branch
          %400 = sbr.rel (%p398) target = $region56
        $region55: #{tpu_custom_call.1} parent=31 // pred_region
          %402 = vsyncadd %s394, 0
          %s403 = smul.addr %s25, 8
          %s404 = scalar_lea.hbm %s3, %s403
          %s406 = sshll.u32 %s397, 4
          %s407 = int_to_ptr.vmem [resolvable:$true] %s406
          %s408 = sshll.u32 %s404, 4
          %s409 = int_to_ptr.hbm [resolvable:$true] %s408
          %411 = dma.vmem_to_hbm [thread:$0]  %s407, 128, %s409, %s394
        $region56: #{tpu_custom_call.1} parent=31 // pred_fallthru
          _
      $region32: #{tpu_custom_call.1} parent=5 // pred_fallthru
        _
      %p412 = scmp.le.s32.totalorder 2, %s16
      // Predicated region
      $region57: #{tpu_custom_call.1} parent=5 // pred_check
        %p413 = pneg %p412
      $region58: #{tpu_custom_call.1} parent=5 // pred_check_branch
        %415 = sbr.rel (%p413) target = $region60
      $region59: #{tpu_custom_call.1} parent=5 // pred_region
        %s416 = ssub.s32 %s16, 2
        // Predicated region
        $region61: #{tpu_custom_call.1} parent=59 // pred_check
          %p417 = pneg %p125
        $region62: #{tpu_custom_call.1} parent=59 // pred_check_branch
          %419 = sbr.rel (%p417) target = $region64
        $region63: #{tpu_custom_call.1} parent=59 // pred_region
          %s420 = sand.u32 %s110, 1
          %s421 = scalar_lea.sflag [#allocation5], %s420
          %s422 = sand.u32 %s110, 1
          %s423 = smul.addr %s422, 8
          %s424 = scalar_lea.vmem [#allocation9], %s423
          %426 = dma.done %s421, 128
        $region64: #{tpu_custom_call.1} parent=59 // pred_fallthru
          _
      $region60: #{tpu_custom_call.1} parent=5 // pred_fallthru
        _
    $region6: #{tpu_custom_call.1} parent=1 // loop_footer
      %s20 = sadd.s32 1, %s16
    $region7: #{tpu_custom_call.1} parent=1 // loop_footer_branch
      %15 = sbr.rel target = $region3
    $region8: #{tpu_custom_call.1} parent=1 // loop_exit
      _
    %427 = vsyncpa [#allocation4], 1
    %s428 = scalar_lea.sflag [#allocation4], 1
    %429 = vsyncpa %s428, 1
    %430 = vsyncpa [#allocation7], 1
    %431 = vsyncpa [#allocation5], 1
    %s432 = scalar_lea.sflag [#allocation5], 1
    %433 = vsyncpa %s432, 1

</llo_original>
